<compile_context>
chip_gen: v5e
topology: v5e:2x2
jax: 0.10.0
libtpu: 0.0.40
codegen_flags: <defaults>
</compile_context>

<pallas_src>
import functools

import jax
import jax.numpy as jnp
from jax.experimental import pallas as pl
from jax.experimental.pallas import tpu as pltpu


def _maxpool_kernel(x_ref, o_ref, xp_ref, wm_ref, *, k, s, p, pad_val, w_off):
    """One (NC tile, output-H tile) block of the max pool.

    x_ref : (H, W, NC_t)        input block (resident across all H steps).
    o_ref : (TH, W_out, NC_t)   output rows for this H tile.
    xp_ref: (H, W_alloc, NC_t)  VMEM scratch: W-padded input rows.
    wm_ref: (HP, W_out, NC_t)   VMEM scratch: per-padded-row horizontal max.
    """
    h, w, nc = x_ref.shape
    _, w_alloc, _ = xp_ref.shape
    hp, w_out, _ = wm_ref.shape
    th = o_ref.shape[0]
    shift = w_off - p  # padded W coordinate c lives at scratch index c + shift

    # ---- Build both scratches once per NC tile (H axis is innermost). ----
    @pl.when(pl.program_id(1) == 0)
    def _build():
        # Halo-only pad fill in W (interior is overwritten right below).
        if w_off > 0:
            xp_ref[:, 0:w_off, :] = jnp.full((h, w_off, nc), pad_val,
                                             dtype=xp_ref.dtype)
        right = w_alloc - (w_off + w)
        if right > 0:
            xp_ref[:, w_off + w:w_alloc, :] = jnp.full((h, right, nc), pad_val,
                                                       dtype=xp_ref.dtype)
        # Interior copy; w_off % 8 == 0 so the bulk store is sublane-aligned.
        xp_ref[:, w_off:w_off + w, :] = x_ref[...]

        # Horizontal (W) k-tap max for every real row (strided sublane reads
        # happen only here, once per NC tile).
        hm = xp_ref[:, pl.ds(shift, w_out, stride=s), :]
        for dj in range(1, k):
            hm = jnp.maximum(hm, xp_ref[:, pl.ds(shift + dj, w_out, stride=s), :])

        # H halo rows of the row-max scratch are pure pad rows.
        if p > 0:
            wm_ref[0:p, :, :] = jnp.full((p, w_out, nc), pad_val,
                                         dtype=wm_ref.dtype)
        bot = hp - (p + h)
        if bot > 0:
            wm_ref[p + h:hp, :, :] = jnp.full((bot, w_out, nc), pad_val,
                                              dtype=wm_ref.dtype)
        wm_ref[p:p + h, :, :] = hm

    # ---- Vertical (H) k-tap max for this output-row tile. ----
    # Taps stride only the cheap leading dim; lanes stay dense.
    row0 = pl.multiple_of(pl.program_id(1) * th * s, th * s)
    acc = wm_ref[pl.ds(row0, th, stride=s), :, :]
    for di in range(1, k):
        acc = jnp.maximum(acc, wm_ref[pl.ds(row0 + di, th, stride=s), :, :])
    o_ref[...] = acc


def _vmem_budget_bytes():
    """Per-generation VMEM budget: ~3/4 of physical, capped at 100 MiB."""
    try:
        cap = int(pltpu.get_tpu_info().vmem_capacity_bytes)
    except Exception:
        cap = 64 * 1024 * 1024  # conservative fallback (v7x per-core VMEM)
    return min(cap * 3 // 4, 100 * 1024 * 1024)


def maxpool2d_pallas(x, kernel_size, stride=None, padding=0,
                     *, tile_h_out=None, tile_nc=None, vmem_budget_bytes=None):
    """Pallas MaxPool2d matching torch.nn.MaxPool2d semantics. x: (N, C, H, W)."""
    k = int(kernel_size)
    s = k if stride is None else int(stride)
    p = int(padding)

    n, c, h, w = x.shape
    h_out = (h + 2 * p - k) // s + 1
    w_out = (w + 2 * p - k) // s + 1
    nc = n * c

    # Lane-dense layout: (N, C, H, W) -> (H, W, N*C).  Pooling only touches
    # the leading (H) / sublane (W) dims; the lane dim is never crossed.
    # TODO(synk): when N*C < 128 (as in the demo) most vector lanes are idle;
    # batching more images/channels per call is the way to fill them.
    xt = jnp.transpose(x, (2, 3, 0, 1)).reshape(h, w, nc)

    # W scratch geometry: interior starts at a sublane offset that is a
    # multiple of 8 so the bulk interior copy is unmasked.
    w_off = ((p + 7) // 8) * 8 if p > 0 else 0
    w_alloc = (w_off - p) + (w + 2 * p)

    itemsize = jnp.dtype(x.dtype).itemsize
    budget = _vmem_budget_bytes() if vmem_budget_bytes is None else int(vmem_budget_bytes)

    def vmem_use(t_nc, t_h):
        n_h_ = pl.cdiv(h_out, t_h)
        hp_ = max(h + 2 * p, (n_h_ * t_h - 1) * s + k)
        elems = (2 * h * w          # input block (double-buffered)
                 + 2 * t_h * w_out  # output block (double-buffered)
                 + h * w_alloc      # xp scratch
                 + hp_ * w_out)     # wm scratch
        return elems * t_nc * itemsize

    # Lane tile: as large as the budget allows (multiple of 128); for
    # nc >= 256 cap it so there are >= 2 NC tiles (v7x megacore parallelism).
    if tile_nc is None:
        if nc <= 128:
            tile_nc = nc
        else:
            tile_nc = pl.cdiv(nc, 128) * 128
            if nc >= 256:
                tile_nc = min(tile_nc, pl.cdiv(pl.cdiv(nc, 2), 128) * 128)
            while tile_nc > 128 and vmem_use(tile_nc, min(h_out, 8)) > budget:
                tile_nc -= 128
    n_nc = pl.cdiv(nc, tile_nc)

    # Output-row tile: biggest that fits the budget (the input stays resident
    # across H steps, so fewer H steps just means less per-step overhead).
    if tile_h_out is None:
        tile_h_out = h_out
        while tile_h_out > 8 and vmem_use(tile_nc, tile_h_out) > budget:
            tile_h_out = pl.cdiv(tile_h_out, 2)
    n_h = pl.cdiv(h_out, tile_h_out)
    # TODO(synk): for very large H*W the whole-image residency per NC tile can
    # still exceed VMEM; that regime needs manual halo DMA (memory_space=pl.ANY).

    hp = max(h + 2 * p, (n_h * tile_h_out - 1) * s + k)

    if jnp.issubdtype(x.dtype, jnp.floating):
        pad_val = float("-inf")           # MaxPool2d's implicit -inf padding
    else:
        pad_val = int(jnp.iinfo(x.dtype).min)

    kernel = functools.partial(_maxpool_kernel, k=k, s=s, p=p,
                               pad_val=pad_val, w_off=w_off)

    out_hwnc = pl.pallas_call(
        kernel,
        out_shape=jax.ShapeDtypeStruct((h_out, w_out, nc), x.dtype),
        grid=(n_nc, n_h),
        in_specs=[pl.BlockSpec((h, w, tile_nc), lambda j, i: (0, 0, j))],
        out_specs=pl.BlockSpec((tile_h_out, w_out, tile_nc),
                               lambda j, i: (i, 0, j)),
        scratch_shapes=[pltpu.VMEM((h, w_alloc, tile_nc), x.dtype),
                        pltpu.VMEM((hp, w_out, tile_nc), x.dtype)],
        compiler_params=pltpu.CompilerParams(
            dimension_semantics=("parallel", "arbitrary"),
            vmem_limit_bytes=int(budget)),
    )(xt)

    # (H_out, W_out, N*C) -> (N, C, H_out, W_out).
    return jnp.transpose(out_hwnc.reshape(h_out, w_out, n, c), (2, 3, 0, 1))


def _reference_maxpool2d(x, kernel_size, stride=None, padding=0):
    """Pure-JAX reference (lax.reduce_window) with PyTorch semantics."""
    k = int(kernel_size)
    s = k if stride is None else int(stride)
    p = int(padding)
    if jnp.issubdtype(x.dtype, jnp.floating):
        init = jnp.asarray(-jnp.inf, dtype=x.dtype)
    else:
        init = jnp.asarray(jnp.iinfo(x.dtype).min, dtype=x.dtype)
    return jax.lax.reduce_window(
        x, init, jax.lax.max,
        window_dimensions=(1, 1, k, k),
        window_strides=(1, 1, s, s),
        padding=((0, 0), (0, 0), (p, p), (p, p)))


if __name__ == "__main__":
    # PoolingLayer(kernel_size=3, stride=2, padding=1); MaxPool2d has no params.
    kernel_size, stride, padding = 3, 2, 1

    key = jax.random.PRNGKey(0)
    x = jax.random.normal(key, (2, 4, 16, 16), dtype=jnp.float32)    # NCHW

    out = maxpool2d_pallas(x, kernel_size, stride, padding)
    out = jax.block_until_ready(out)

    ref = _reference_maxpool2d(x, kernel_size, stride, padding)
    assert out.shape == ref.shape, (out.shape, ref.shape)
    assert jnp.allclose(out, ref), "Pallas maxpool mismatch vs reference"

    print("KERNEL_OK")
</pallas_src>

<mosaic_0001>
module attributes {stable_mosaic.version = 11 : i64} {
  func.func @_maxpool_kernel(%arg0: i32, %arg1: i32, %arg2: memref<16x16x8xf32, #tpu.memory_space<vmem>>, %arg3: memref<8x8x8xf32, #tpu.memory_space<vmem>>, %arg4: memref<16x25x8xf32, #tpu.memory_space<vmem>>, %arg5: memref<18x8x8xf32, #tpu.memory_space<vmem>>) attributes {dimension_semantics = [#tpu.dimension_semantics<parallel>, #tpu.dimension_semantics<arbitrary>], iteration_bounds = array<i64: 1, 1>, scalar_prefetch = 0 : i64, scratch_operands = 2 : i64, tpu.core_type = #tpu.core_type<tc>, window_params = [{transform_indices = @transform_0, window_bounds = array<i64: 16, 16, 8>}, {transform_indices = @transform_1, window_bounds = array<i64: 8, 8, 8>}]} {
    %c0_i32 = arith.constant 0 : i32
    %0 = arith.cmpi eq, %arg1, %c0_i32 : i32
    %1 = arith.extui %0 : i1 to i32
    %c0_i32_0 = arith.constant 0 : i32
    %2 = arith.cmpi ne, %1, %c0_i32_0 : i32
    scf.if %2 {
      %cst = arith.constant 0xFF800000 : f32
      %17 = vector.broadcast %cst : f32 to vector<16x8x8xf32>
      %c0_10 = arith.constant 0 : index
      %c0_11 = arith.constant 0 : index
      %c0_12 = arith.constant 0 : index
      %18 = vector.load %arg4[%c0_10, %c0_11, %c0_12] : memref<16x25x8xf32, #tpu.memory_space<vmem>>, vector<16x8x8xf32>
      tpu.vector_store %arg4[%c0_10, %c0_11, %c0_12], %17 {strides = array<i32>} : memref<16x25x8xf32, #tpu.memory_space<vmem>>, vector<16x8x8xf32>,
      %cst_13 = arith.constant 0xFF800000 : f32
      %19 = vector.broadcast %cst_13 : f32 to vector<16x1x8xf32>
      %c0_14 = arith.constant 0 : index
      %c24 = arith.constant 24 : index
      %c0_15 = arith.constant 0 : index
      %20 = vector.load %arg4[%c0_14, %c24, %c0_15] : memref<16x25x8xf32, #tpu.memory_space<vmem>>, vector<16x1x8xf32>
      tpu.vector_store %arg4[%c0_14, %c24, %c0_15], %19 {strides = array<i32>} : memref<16x25x8xf32, #tpu.memory_space<vmem>>, vector<16x1x8xf32>,
      %c0_16 = arith.constant 0 : index
      %c0_17 = arith.constant 0 : index
      %c0_18 = arith.constant 0 : index
      %21 = vector.load %arg2[%c0_16, %c0_17, %c0_18] : memref<16x16x8xf32, #tpu.memory_space<vmem>>, vector<16x16x8xf32>
      %c0_19 = arith.constant 0 : index
      %c8 = arith.constant 8 : index
      %c0_20 = arith.constant 0 : index
      %22 = vector.load %arg4[%c0_19, %c8, %c0_20] : memref<16x25x8xf32, #tpu.memory_space<vmem>>, vector<16x16x8xf32>
      tpu.vector_store %arg4[%c0_19, %c8, %c0_20], %21 {strides = array<i32>} : memref<16x25x8xf32, #tpu.memory_space<vmem>>, vector<16x16x8xf32>,
      %c0_21 = arith.constant 0 : index
      %c7 = arith.constant 7 : index
      %c0_22 = arith.constant 0 : index
      %23 = tpu.strided_load %arg4[%c0_21, %c7, %c0_22] {strides = array<i32: 1, 2, 1>} : memref<16x25x8xf32, #tpu.memory_space<vmem>>, vector<16x8x8xf32>
      %c0_23 = arith.constant 0 : index
      %c8_24 = arith.constant 8 : index
      %c0_25 = arith.constant 0 : index
      %24 = tpu.strided_load %arg4[%c0_23, %c8_24, %c0_25] {strides = array<i32: 1, 2, 1>} : memref<16x25x8xf32, #tpu.memory_space<vmem>>, vector<16x8x8xf32>
      %25 = arith.maximumf %23, %24 : vector<16x8x8xf32>
      %c0_26 = arith.constant 0 : index
      %c9 = arith.constant 9 : index
      %c0_27 = arith.constant 0 : index
      %26 = tpu.strided_load %arg4[%c0_26, %c9, %c0_27] {strides = array<i32: 1, 2, 1>} : memref<16x25x8xf32, #tpu.memory_space<vmem>>, vector<16x8x8xf32>
      %27 = arith.maximumf %25, %26 : vector<16x8x8xf32>
      %cst_28 = arith.constant 0xFF800000 : f32
      %28 = vector.broadcast %cst_28 : f32 to vector<1x8x8xf32>
      %c0_29 = arith.constant 0 : index
      %c0_30 = arith.constant 0 : index
      %c0_31 = arith.constant 0 : index
      %29 = vector.load %arg5[%c0_29, %c0_30, %c0_31] : memref<18x8x8xf32, #tpu.memory_space<vmem>>, vector<1x8x8xf32>
      tpu.vector_store %arg5[%c0_29, %c0_30, %c0_31], %28 {strides = array<i32>} : memref<18x8x8xf32, #tpu.memory_space<vmem>>, vector<1x8x8xf32>,
      %cst_32 = arith.constant 0xFF800000 : f32
      %30 = vector.broadcast %cst_32 : f32 to vector<1x8x8xf32>
      %c17 = arith.constant 17 : index
      %c0_33 = arith.constant 0 : index
      %c0_34 = arith.constant 0 : index
      %31 = vector.load %arg5[%c17, %c0_33, %c0_34] : memref<18x8x8xf32, #tpu.memory_space<vmem>>, vector<1x8x8xf32>
      tpu.vector_store %arg5[%c17, %c0_33, %c0_34], %30 {strides = array<i32>} : memref<18x8x8xf32, #tpu.memory_space<vmem>>, vector<1x8x8xf32>,
      %c1 = arith.constant 1 : index
      %c0_35 = arith.constant 0 : index
      %c0_36 = arith.constant 0 : index
      %32 = vector.load %arg5[%c1, %c0_35, %c0_36] : memref<18x8x8xf32, #tpu.memory_space<vmem>>, vector<16x8x8xf32>
      tpu.vector_store %arg5[%c1, %c0_35, %c0_36], %27 {strides = array<i32>} : memref<18x8x8xf32, #tpu.memory_space<vmem>>, vector<16x8x8xf32>,
    } else {
    }
    %c8_i32 = arith.constant 8 : i32
    %3 = arith.muli %arg1, %c8_i32 : i32
    %c2_i32 = arith.constant 2 : i32
    %4 = arith.muli %3, %c2_i32 : i32
    %5 = tpu.assume_multiple %4, 16 : i32
    %6 = arith.index_cast %5 : i32 to index
    %c0 = arith.constant 0 : index
    %c0_1 = arith.constant 0 : index
    %7 = tpu.strided_load %arg5[%6, %c0, %c0_1] {strides = array<i32: 2, 1, 1>} : memref<18x8x8xf32, #tpu.memory_space<vmem>>, vector<8x8x8xf32>
    %c1_i32 = arith.constant 1 : i32
    %8 = arith.addi %5, %c1_i32 : i32
    %9 = arith.index_cast %8 : i32 to index
    %c0_2 = arith.constant 0 : index
    %c0_3 = arith.constant 0 : index
    %10 = tpu.strided_load %arg5[%9, %c0_2, %c0_3] {strides = array<i32: 2, 1, 1>} : memref<18x8x8xf32, #tpu.memory_space<vmem>>, vector<8x8x8xf32>
    %11 = arith.maximumf %7, %10 : vector<8x8x8xf32>
    %c2_i32_4 = arith.constant 2 : i32
    %12 = arith.addi %5, %c2_i32_4 : i32
    %13 = arith.index_cast %12 : i32 to index
    %c0_5 = arith.constant 0 : index
    %c0_6 = arith.constant 0 : index
    %14 = tpu.strided_load %arg5[%13, %c0_5, %c0_6] {strides = array<i32: 2, 1, 1>} : memref<18x8x8xf32, #tpu.memory_space<vmem>>, vector<8x8x8xf32>
    %15 = arith.maximumf %11, %14 : vector<8x8x8xf32>
    %c0_7 = arith.constant 0 : index
    %c0_8 = arith.constant 0 : index
    %c0_9 = arith.constant 0 : index
    %16 = vector.load %arg3[%c0_7, %c0_8, %c0_9] : memref<8x8x8xf32, #tpu.memory_space<vmem>>, vector<8x8x8xf32>
    tpu.vector_store %arg3[%c0_7, %c0_8, %c0_9], %15 {strides = array<i32>} : memref<8x8x8xf32, #tpu.memory_space<vmem>>, vector<8x8x8xf32>,
    return
  }
  func.func @transform_0(%arg0: i32, %arg1: i32) -> (i32, i32, i32) {
    %c0_i32 = arith.constant 0 : i32
    %c0_i32_0 = arith.constant 0 : i32
    %c0_i32_1 = arith.constant 0 : i32
    return %c0_i32, %c0_i32_0, %arg0 : i32, i32, i32
  }
  func.func @transform_1(%arg0: i32, %arg1: i32) -> (i32, i32, i32) {
    %c0_i32 = arith.constant 0 : i32
    %c0_i32_0 = arith.constant 0 : i32
    return %arg1, %c0_i32, %arg0 : i32, i32, i32
  }
}

</mosaic_0001>

<llo_original>
// kernel: tpu_custom_call.1
$region0: #{tpu_custom_call.1}
  #allocation0 [shape = 'u32[]', space=smem, size = 0x4, offset = 0x4, fixed_abs, tag = 'smem constant byte address 0x4 - core index']
  #allocation1 [shape = 'u32[72,128]{1,0:T(1,128)}', space=vmem, size = 0x9000, scoped, tag = 'internal scratch']
  #allocation2 [shape = 'f32[16,25,8]{2,1,0:T(8,128)}', space=vmem, size = 0x40000, scoped, tag = 'scratch operand']
  #allocation3 [shape = 'f32[18,8,8]{2,1,0:T(8,128)}', space=vmem, size = 0x12000, scoped, tag = 'scratch operand']
  %s0 = inlined_call_operand.vmem [shape: f32[16,16,8], index: 0, kind: input, shape index: {}]
  %s1 = inlined_call_operand.hbm [shape: f32[8,8,8], index: 1, kind: output, shape index: {}]
  %s2 = sld [smem:[#allocation0]]
  $region18: #{tpu_custom_call.1} parent=0
    _
  %s4 = ssub.s32 1, %s2
  %s5 = scalar_select 0, %s4, %s2
  $region1: #{tpu_custom_call.1} parent=0
    #allocation4 [shape = 'u8[32768]{0}', space=vmem, size = 0x8000, scoped, tag = 'output window, operand 0, single buffered']
    #allocation5 [shape = 's32[1]{0}', space=sflag, size = 0x4, scoped, tag = 'scoped memory for tpu_custom_call.1']
    %6 = vsyncpa [#allocation5], 0
    // Predicated region
    $region2: #{tpu_custom_call.1} parent=1 // pred_check
      _
    $region3: #{tpu_custom_call.1} parent=1 // pred_check_branch
      %8 = sbr.rel (0) target = $region5
    $region4: #{tpu_custom_call.1} parent=1 // pred_region
      _
    $region5: #{tpu_custom_call.1} parent=1 // pred_fallthru
      _
    %p9 = scmp.eq.s32.totalorder 0, 0
    // Predicated region
    $region6: #{tpu_custom_call.1} parent=1 // pred_check
      %p10 = pneg %p9
    $region7: #{tpu_custom_call.1} parent=1 // pred_check_branch
      %12 = sbr.rel (%p10) target = $region9
    $region8: #{tpu_custom_call.1} parent=1 // pred_region
      %vm13 = vcmask 64512
      %14 = vst.msk [vmem:[#allocation2] sm:$0xff] %vm13, -inf
      %15 = vst.msk [vmem:[#allocation2 + $0x20] sm:$0xff] %vm13, -inf
      %16 = vst.msk [vmem:[#allocation2 + $0x40] sm:$0xff] %vm13, -inf
      %17 = vst.msk [vmem:[#allocation2 + $0x60] sm:$0xff] %vm13, -inf
      %18 = vst.msk [vmem:[#allocation2 + $0x80] sm:$0xff] %vm13, -inf
      %19 = vst.msk [vmem:[#allocation2 + $0xa0] sm:$0xff] %vm13, -inf
      %20 = vst.msk [vmem:[#allocation2 + $0xc0] sm:$0xff] %vm13, -inf
      %21 = vst.msk [vmem:[#allocation2 + $0xe0] sm:$0xff] %vm13, -inf
      %22 = vst.msk [vmem:[#allocation2 + $0x100] sm:$0xff] %vm13, -inf
      %23 = vst.msk [vmem:[#allocation2 + $0x120] sm:$0xff] %vm13, -inf
      %24 = vst.msk [vmem:[#allocation2 + $0x140] sm:$0xff] %vm13, -inf
      %25 = vst.msk [vmem:[#allocation2 + $0x160] sm:$0xff] %vm13, -inf
      %26 = vst.msk [vmem:[#allocation2 + $0x180] sm:$0xff] %vm13, -inf
      %27 = vst.msk [vmem:[#allocation2 + $0x1a0] sm:$0xff] %vm13, -inf
      %28 = vst.msk [vmem:[#allocation2 + $0x1c0] sm:$0xff] %vm13, -inf
      %29 = vst.msk [vmem:[#allocation2 + $0x1e0] sm:$0xff] %vm13, -inf
      %vm30 = vcmask 57344
      %31 = vst.msk [vmem:[#allocation2 + $0x18] sm:$0x1] %vm30, -inf
      %32 = vst.msk [vmem:[#allocation2 + $0x38] sm:$0x1] %vm30, -inf
      %33 = vst.msk [vmem:[#allocation2 + $0x58] sm:$0x1] %vm30, -inf
      %34 = vst.msk [vmem:[#allocation2 + $0x78] sm:$0x1] %vm30, -inf
      %35 = vst.msk [vmem:[#allocation2 + $0x98] sm:$0x1] %vm30, -inf
      %36 = vst.msk [vmem:[#allocation2 + $0xb8] sm:$0x1] %vm30, -inf
      %37 = vst.msk [vmem:[#allocation2 + $0xd8] sm:$0x1] %vm30, -inf
      %38 = vst.msk [vmem:[#allocation2 + $0xf8] sm:$0x1] %vm30, -inf
      %39 = vst.msk [vmem:[#allocation2 + $0x118] sm:$0x1] %vm30, -inf
      %40 = vst.msk [vmem:[#allocation2 + $0x138] sm:$0x1] %vm30, -inf
      %41 = vst.msk [vmem:[#allocation2 + $0x158] sm:$0x1] %vm30, -inf
      %42 = vst.msk [vmem:[#allocation2 + $0x178] sm:$0x1] %vm30, -inf
      %43 = vst.msk [vmem:[#allocation2 + $0x198] sm:$0x1] %vm30, -inf
      %44 = vst.msk [vmem:[#allocation2 + $0x1b8] sm:$0x1] %vm30, -inf
      %45 = vst.msk [vmem:[#allocation2 + $0x1d8] sm:$0x1] %vm30, -inf
      %46 = vst.msk [vmem:[#allocation2 + $0x1f8] sm:$0x1] %vm30, -inf
      %v47 = vld [vmem:[%s0] sm:$0xff]
      %v48 = vld [vmem:[%s0 + $0x8] sm:$0xff]
      %v49 = vld [vmem:[%s0 + $0x10] sm:$0xff]
      %v50 = vld [vmem:[%s0 + $0x18] sm:$0xff]
      %v51 = vld [vmem:[%s0 + $0x20] sm:$0xff]
      %v52 = vld [vmem:[%s0 + $0x28] sm:$0xff]
      %v53 = vld [vmem:[%s0 + $0x30] sm:$0xff]
      %v54 = vld [vmem:[%s0 + $0x38] sm:$0xff]
      %v55 = vld [vmem:[%s0 + $0x40] sm:$0xff]
      %v56 = vld [vmem:[%s0 + $0x48] sm:$0xff]
      %v57 = vld [vmem:[%s0 + $0x50] sm:$0xff]
      %v58 = vld [vmem:[%s0 + $0x58] sm:$0xff]
      %v59 = vld [vmem:[%s0 + $0x60] sm:$0xff]
      %v60 = vld [vmem:[%s0 + $0x68] sm:$0xff]
      %v61 = vld [vmem:[%s0 + $0x70] sm:$0xff]
      %v62 = vld [vmem:[%s0 + $0x78] sm:$0xff]
      %v63 = vld [vmem:[%s0 + $0x80] sm:$0xff]
      %v64 = vld [vmem:[%s0 + $0x88] sm:$0xff]
      %v65 = vld [vmem:[%s0 + $0x90] sm:$0xff]
      %v66 = vld [vmem:[%s0 + $0x98] sm:$0xff]
      %v67 = vld [vmem:[%s0 + $0xa0] sm:$0xff]
      %v68 = vld [vmem:[%s0 + $0xa8] sm:$0xff]
      %v69 = vld [vmem:[%s0 + $0xb0] sm:$0xff]
      %v70 = vld [vmem:[%s0 + $0xb8] sm:$0xff]
      %v71 = vld [vmem:[%s0 + $0xc0] sm:$0xff]
      %v72 = vld [vmem:[%s0 + $0xc8] sm:$0xff]
      %v73 = vld [vmem:[%s0 + $0xd0] sm:$0xff]
      %v74 = vld [vmem:[%s0 + $0xd8] sm:$0xff]
      %v75 = vld [vmem:[%s0 + $0xe0] sm:$0xff]
      %v76 = vld [vmem:[%s0 + $0xe8] sm:$0xff]
      %v77 = vld [vmem:[%s0 + $0xf0] sm:$0xff]
      %v78 = vld [vmem:[%s0 + $0xf8] sm:$0xff]
      %79 = vst.msk [vmem:[#allocation2 + $0x8] sm:$0xff] %vm13, %v47
      %80 = vst.msk [vmem:[#allocation2 + $0x10] sm:$0xff] %vm13, %v48
      %81 = vst.msk [vmem:[#allocation2 + $0x28] sm:$0xff] %vm13, %v49
      %82 = vst.msk [vmem:[#allocation2 + $0x30] sm:$0xff] %vm13, %v50
      %83 = vst.msk [vmem:[#allocation2 + $0x48] sm:$0xff] %vm13, %v51
      %84 = vst.msk [vmem:[#allocation2 + $0x50] sm:$0xff] %vm13, %v52
      %85 = vst.msk [vmem:[#allocation2 + $0x68] sm:$0xff] %vm13, %v53
      %86 = vst.msk [vmem:[#allocation2 + $0x70] sm:$0xff] %vm13, %v54
      %87 = vst.msk [vmem:[#allocation2 + $0x88] sm:$0xff] %vm13, %v55
      %88 = vst.msk [vmem:[#allocation2 + $0x90] sm:$0xff] %vm13, %v56
      %89 = vst.msk [vmem:[#allocation2 + $0xa8] sm:$0xff] %vm13, %v57
      %90 = vst.msk [vmem:[#allocation2 + $0xb0] sm:$0xff] %vm13, %v58
      %91 = vst.msk [vmem:[#allocation2 + $0xc8] sm:$0xff] %vm13, %v59
      %92 = vst.msk [vmem:[#allocation2 + $0xd0] sm:$0xff] %vm13, %v60
      %93 = vst.msk [vmem:[#allocation2 + $0xe8] sm:$0xff] %vm13, %v61
      %94 = vst.msk [vmem:[#allocation2 + $0xf0] sm:$0xff] %vm13, %v62
      %95 = vst.msk [vmem:[#allocation2 + $0x108] sm:$0xff] %vm13, %v63
      %96 = vst.msk [vmem:[#allocation2 + $0x110] sm:$0xff] %vm13, %v64
      %97 = vst.msk [vmem:[#allocation2 + $0x128] sm:$0xff] %vm13, %v65
      %98 = vst.msk [vmem:[#allocation2 + $0x130] sm:$0xff] %vm13, %v66
      %99 = vst.msk [vmem:[#allocation2 + $0x148] sm:$0xff] %vm13, %v67
      %100 = vst.msk [vmem:[#allocation2 + $0x150] sm:$0xff] %vm13, %v68
      %101 = vst.msk [vmem:[#allocation2 + $0x168] sm:$0xff] %vm13, %v69
      %102 = vst.msk [vmem:[#allocation2 + $0x170] sm:$0xff] %vm13, %v70
      %103 = vst.msk [vmem:[#allocation2 + $0x188] sm:$0xff] %vm13, %v71
      %104 = vst.msk [vmem:[#allocation2 + $0x190] sm:$0xff] %vm13, %v72
      %105 = vst.msk [vmem:[#allocation2 + $0x1a8] sm:$0xff] %vm13, %v73
      %106 = vst.msk [vmem:[#allocation2 + $0x1b0] sm:$0xff] %vm13, %v74
      %107 = vst.msk [vmem:[#allocation2 + $0x1c8] sm:$0xff] %vm13, %v75
      %108 = vst.msk [vmem:[#allocation2 + $0x1d0] sm:$0xff] %vm13, %v76
      %109 = vst.msk [vmem:[#allocation2 + $0x1e8] sm:$0xff] %vm13, %v77
      %110 = vst.msk [vmem:[#allocation2 + $0x1f0] sm:$0xff] %vm13, %v78
      %s111 = scalar_lea.vmem [#allocation2], 7
      %v112 = vld [vmem:[%s111] ss:$2 sm:$0xff]
      %s113 = scalar_lea.vmem [#allocation2], 39
      %v114 = vld [vmem:[%s113] ss:$2 sm:$0xff]
      %s115 = scalar_lea.vmem [#allocation2], 71
      %v116 = vld [vmem:[%s115] ss:$2 sm:$0xff]
      %s117 = scalar_lea.vmem [#allocation2], 103
      %v118 = vld [vmem:[%s117] ss:$2 sm:$0xff]
      %s119 = scalar_lea.vmem [#allocation2], 135
      %v120 = vld [vmem:[%s119] ss:$2 sm:$0xff]
      %s121 = scalar_lea.vmem [#allocation2], 167
      %v122 = vld [vmem:[%s121] ss:$2 sm:$0xff]
      %s123 = scalar_lea.vmem [#allocation2], 199
      %v124 = vld [vmem:[%s123] ss:$2 sm:$0xff]
      %s125 = scalar_lea.vmem [#allocation2], 231
      %v126 = vld [vmem:[%s125] ss:$2 sm:$0xff]
      %s127 = scalar_lea.vmem [#allocation2], 263
      %v128 = vld [vmem:[%s127] ss:$2 sm:$0xff]
      %s129 = scalar_lea.vmem [#allocation2], 295
      %v130 = vld [vmem:[%s129] ss:$2 sm:$0xff]
      %s131 = scalar_lea.vmem [#allocation2], 327
      %v132 = vld [vmem:[%s131] ss:$2 sm:$0xff]
      %s133 = scalar_lea.vmem [#allocation2], 359
      %v134 = vld [vmem:[%s133] ss:$2 sm:$0xff]
      %s135 = scalar_lea.vmem [#allocation2], 391
      %v136 = vld [vmem:[%s135] ss:$2 sm:$0xff]
      %s137 = scalar_lea.vmem [#allocation2], 423
      %v138 = vld [vmem:[%s137] ss:$2 sm:$0xff]
      %s139 = scalar_lea.vmem [#allocation2], 455
      %v140 = vld [vmem:[%s139] ss:$2 sm:$0xff]
      %s141 = scalar_lea.vmem [#allocation2], 487
      %v142 = vld [vmem:[%s141] ss:$2 sm:$0xff]
      %s143 = scalar_lea.vmem [#allocation2], 8
      %v144 = vld [vmem:[%s143] ss:$2 sm:$0xff]
      %s145 = scalar_lea.vmem [#allocation2], 40
      %v146 = vld [vmem:[%s145] ss:$2 sm:$0xff]
      %s147 = scalar_lea.vmem [#allocation2], 72
      %v148 = vld [vmem:[%s147] ss:$2 sm:$0xff]
      %s149 = scalar_lea.vmem [#allocation2], 104
      %v150 = vld [vmem:[%s149] ss:$2 sm:$0xff]
      %s151 = scalar_lea.vmem [#allocation2], 136
      %v152 = vld [vmem:[%s151] ss:$2 sm:$0xff]
      %s153 = scalar_lea.vmem [#allocation2], 168
      %v154 = vld [vmem:[%s153] ss:$2 sm:$0xff]
      %s155 = scalar_lea.vmem [#allocation2], 200
      %v156 = vld [vmem:[%s155] ss:$2 sm:$0xff]
      %s157 = scalar_lea.vmem [#allocation2], 232
      %v158 = vld [vmem:[%s157] ss:$2 sm:$0xff]
      %s159 = scalar_lea.vmem [#allocation2], 264
      %v160 = vld [vmem:[%s159] ss:$2 sm:$0xff]
      %s161 = scalar_lea.vmem [#allocation2], 296
      %v162 = vld [vmem:[%s161] ss:$2 sm:$0xff]
      %s163 = scalar_lea.vmem [#allocation2], 328
      %v164 = vld [vmem:[%s163] ss:$2 sm:$0xff]
      %s165 = scalar_lea.vmem [#allocation2], 360
      %v166 = vld [vmem:[%s165] ss:$2 sm:$0xff]
      %s167 = scalar_lea.vmem [#allocation2], 392
      %v168 = vld [vmem:[%s167] ss:$2 sm:$0xff]
      %s169 = scalar_lea.vmem [#allocation2], 424
      %v170 = vld [vmem:[%s169] ss:$2 sm:$0xff]
      %s171 = scalar_lea.vmem [#allocation2], 456
      %v172 = vld [vmem:[%s171] ss:$2 sm:$0xff]
      %s173 = scalar_lea.vmem [#allocation2], 488
      %v174 = vld [vmem:[%s173] ss:$2 sm:$0xff]
      %v175 = vmax.f32 %v112, %v144
      %v176 = vmax.f32 %v114, %v146
      %v177 = vmax.f32 %v116, %v148
      %v178 = vmax.f32 %v118, %v150
      %v179 = vmax.f32 %v120, %v152
      %v180 = vmax.f32 %v122, %v154
      %v181 = vmax.f32 %v124, %v156
      %v182 = vmax.f32 %v126, %v158
      %v183 = vmax.f32 %v128, %v160
      %v184 = vmax.f32 %v130, %v162
      %v185 = vmax.f32 %v132, %v164
      %v186 = vmax.f32 %v134, %v166
      %v187 = vmax.f32 %v136, %v168
      %v188 = vmax.f32 %v138, %v170
      %v189 = vmax.f32 %v140, %v172
      %v190 = vmax.f32 %v142, %v174
      %s191 = scalar_lea.vmem [#allocation2], 9
      %v192 = vld [vmem:[%s191] ss:$2 sm:$0xff]
      %s193 = scalar_lea.vmem [#allocation2], 41
      %v194 = vld [vmem:[%s193] ss:$2 sm:$0xff]
      %s195 = scalar_lea.vmem [#allocation2], 73
      %v196 = vld [vmem:[%s195] ss:$2 sm:$0xff]
      %s197 = scalar_lea.vmem [#allocation2], 105
      %v198 = vld [vmem:[%s197] ss:$2 sm:$0xff]
      %s199 = scalar_lea.vmem [#allocation2], 137
      %v200 = vld [vmem:[%s199] ss:$2 sm:$0xff]
      %s201 = scalar_lea.vmem [#allocation2], 169
      %v202 = vld [vmem:[%s201] ss:$2 sm:$0xff]
      %s203 = scalar_lea.vmem [#allocation2], 201
      %v204 = vld [vmem:[%s203] ss:$2 sm:$0xff]
      %s205 = scalar_lea.vmem [#allocation2], 233
      %v206 = vld [vmem:[%s205] ss:$2 sm:$0xff]
      %s207 = scalar_lea.vmem [#allocation2], 265
      %v208 = vld [vmem:[%s207] ss:$2 sm:$0xff]
      %s209 = scalar_lea.vmem [#allocation2], 297
      %v210 = vld [vmem:[%s209] ss:$2 sm:$0xff]
      %s211 = scalar_lea.vmem [#allocation2], 329
      %v212 = vld [vmem:[%s211] ss:$2 sm:$0xff]
      %s213 = scalar_lea.vmem [#allocation2], 361
      %v214 = vld [vmem:[%s213] ss:$2 sm:$0xff]
      %s215 = scalar_lea.vmem [#allocation2], 393
      %v216 = vld [vmem:[%s215] ss:$2 sm:$0xff]
      %s217 = scalar_lea.vmem [#allocation2], 425
      %v218 = vld [vmem:[%s217] ss:$2 sm:$0xff]
      %s219 = scalar_lea.vmem [#allocation2], 457
      %v220 = vld [vmem:[%s219] ss:$2 sm:$0xff]
      %s221 = scalar_lea.vmem [#allocation2], 489
      %v222 = vld [vmem:[%s221] ss:$2 sm:$0xff]
      %v223 = vmax.f32 %v175, %v192
      %v224 = vmax.f32 %v176, %v194
      %v225 = vmax.f32 %v177, %v196
      %v226 = vmax.f32 %v178, %v198
      %v227 = vmax.f32 %v179, %v200
      %v228 = vmax.f32 %v180, %v202
      %v229 = vmax.f32 %v181, %v204
      %v230 = vmax.f32 %v182, %v206
      %v231 = vmax.f32 %v183, %v208
      %v232 = vmax.f32 %v184, %v210
      %v233 = vmax.f32 %v185, %v212
      %v234 = vmax.f32 %v186, %v214
      %v235 = vmax.f32 %v187, %v216
      %v236 = vmax.f32 %v188, %v218
      %v237 = vmax.f32 %v189, %v220
      %v238 = vmax.f32 %v190, %v222
      %239 = vst.msk [vmem:[#allocation3] sm:$0xff] %vm13, -inf
      %s240 = scalar_lea.vmem [#allocation3], 136
      %241 = vst.msk [vmem:[%s240] sm:$0xff] %vm13, -inf
      %s242 = scalar_lea.vmem [#allocation3], 8
      %243 = vst.msk [vmem:[%s242] sm:$0xff] %vm13, %v223
      %244 = vst.msk [vmem:[%s242 + $0x8] sm:$0xff] %vm13, %v224
      %245 = vst.msk [vmem:[%s242 + $0x10] sm:$0xff] %vm13, %v225
      %246 = vst.msk [vmem:[%s242 + $0x18] sm:$0xff] %vm13, %v226
      %247 = vst.msk [vmem:[%s242 + $0x20] sm:$0xff] %vm13, %v227
      %248 = vst.msk [vmem:[%s242 + $0x28] sm:$0xff] %vm13, %v228
      %249 = vst.msk [vmem:[%s242 + $0x30] sm:$0xff] %vm13, %v229
      %250 = vst.msk [vmem:[%s242 + $0x38] sm:$0xff] %vm13, %v230
      %251 = vst.msk [vmem:[%s242 + $0x40] sm:$0xff] %vm13, %v231
      %252 = vst.msk [vmem:[%s242 + $0x48] sm:$0xff] %vm13, %v232
      %253 = vst.msk [vmem:[%s242 + $0x50] sm:$0xff] %vm13, %v233
      %254 = vst.msk [vmem:[%s242 + $0x58] sm:$0xff] %vm13, %v234
      %255 = vst.msk [vmem:[%s242 + $0x60] sm:$0xff] %vm13, %v235
      %256 = vst.msk [vmem:[%s242 + $0x68] sm:$0xff] %vm13, %v236
      %257 = vst.msk [vmem:[%s242 + $0x70] sm:$0xff] %vm13, %v237
      %258 = vst.msk [vmem:[%s242 + $0x78] sm:$0xff] %vm13, %v238
    $region9: #{tpu_custom_call.1} parent=1 // pred_fallthru
      _
    %s259 = smul.u32 0, 16
    %s260 = smul.u32 %s259, 8
    %s261 = scalar_lea.vmem [#allocation3], %s260
    %v262 = vld [vmem:[%s261] sm:$0xff]
    %v263 = vld [vmem:[%s261 + $0x10] sm:$0xff]
    %v264 = vld [vmem:[%s261 + $0x20] sm:$0xff]
    %v265 = vld [vmem:[%s261 + $0x30] sm:$0xff]
    %v266 = vld [vmem:[%s261 + $0x40] sm:$0xff]
    %v267 = vld [vmem:[%s261 + $0x50] sm:$0xff]
    %v268 = vld [vmem:[%s261 + $0x60] sm:$0xff]
    %v269 = vld [vmem:[%s261 + $0x70] sm:$0xff]
    %s270 = sadd.s32 %s259, 1
    %s271 = smul.u32 %s270, 8
    %s272 = scalar_lea.vmem [#allocation3], %s271
    %v273 = vld [vmem:[%s272] sm:$0xff]
    %v274 = vld [vmem:[%s272 + $0x10] sm:$0xff]
    %v275 = vld [vmem:[%s272 + $0x20] sm:$0xff]
    %v276 = vld [vmem:[%s272 + $0x30] sm:$0xff]
    %v277 = vld [vmem:[%s272 + $0x40] sm:$0xff]
    %v278 = vld [vmem:[%s272 + $0x50] sm:$0xff]
    %v279 = vld [vmem:[%s272 + $0x60] sm:$0xff]
    %v280 = vld [vmem:[%s272 + $0x70] sm:$0xff]
    %v281 = vmax.f32 %v262, %v273
    %v282 = vmax.f32 %v263, %v274
    %v283 = vmax.f32 %v264, %v275
    %v284 = vmax.f32 %v265, %v276
    %v285 = vmax.f32 %v266, %v277
    %v286 = vmax.f32 %v267, %v278
    %v287 = vmax.f32 %v268, %v279
    %v288 = vmax.f32 %v269, %v280
    %s289 = sadd.s32 %s259, 2
    %s290 = smul.u32 %s289, 8
    %s291 = scalar_lea.vmem [#allocation3], %s290
    %v292 = vld [vmem:[%s291] sm:$0xff]
    %v293 = vld [vmem:[%s291 + $0x10] sm:$0xff]
    %v294 = vld [vmem:[%s291 + $0x20] sm:$0xff]
    %v295 = vld [vmem:[%s291 + $0x30] sm:$0xff]
    %v296 = vld [vmem:[%s291 + $0x40] sm:$0xff]
    %v297 = vld [vmem:[%s291 + $0x50] sm:$0xff]
    %v298 = vld [vmem:[%s291 + $0x60] sm:$0xff]
    %v299 = vld [vmem:[%s291 + $0x70] sm:$0xff]
    %v300 = vmax.f32 %v281, %v292
    %v301 = vmax.f32 %v282, %v293
    %v302 = vmax.f32 %v283, %v294
    %v303 = vmax.f32 %v284, %v295
    %v304 = vmax.f32 %v285, %v296
    %v305 = vmax.f32 %v286, %v297
    %v306 = vmax.f32 %v287, %v298
    %v307 = vmax.f32 %v288, %v299
    %vm308 = vcmask 64512
    %309 = vst.msk [vmem:[#allocation4] sm:$0xff] %vm308, %v300
    %310 = vst.msk [vmem:[#allocation4 + $0x8] sm:$0xff] %vm308, %v301
    %311 = vst.msk [vmem:[#allocation4 + $0x10] sm:$0xff] %vm308, %v302
    %312 = vst.msk [vmem:[#allocation4 + $0x18] sm:$0xff] %vm308, %v303
    %313 = vst.msk [vmem:[#allocation4 + $0x20] sm:$0xff] %vm308, %v304
    %314 = vst.msk [vmem:[#allocation4 + $0x28] sm:$0xff] %vm308, %v305
    %315 = vst.msk [vmem:[#allocation4 + $0x30] sm:$0xff] %vm308, %v306
    %316 = vst.msk [vmem:[#allocation4 + $0x38] sm:$0xff] %vm308, %v307
    // Predicated region
    $region10: #{tpu_custom_call.1} parent=1 // pred_check
      _
    $region11: #{tpu_custom_call.1} parent=1 // pred_check_branch
      %318 = sbr.rel (0) target = $region13
    $region12: #{tpu_custom_call.1} parent=1 // pred_region
      %320 = vsyncadd [#allocation5], 0
      %s321 = sshll.u32 [#allocation4], 4
      %s322 = int_to_ptr.vmem [resolvable:$true] %s321
      %s323 = sshll.u32 %s1, 4
      %s324 = int_to_ptr.hbm [resolvable:$true] %s323
      %329 = dma.vmem_to_hbm [thread:$0]  %s322, 1024, %s324, [#allocation5], 128, 128, 8
    $region13: #{tpu_custom_call.1} parent=1 // pred_fallthru
      _
    // Predicated region
    $region14: #{tpu_custom_call.1} parent=1 // pred_check
      _
    $region15: #{tpu_custom_call.1} parent=1 // pred_check_branch
      %331 = sbr.rel (0) target = $region17
    $region16: #{tpu_custom_call.1} parent=1 // pred_region
      %333 = dma.done [#allocation5], 1024
    $region17: #{tpu_custom_call.1} parent=1 // pred_fallthru
      _
    %334 = vsyncpa [#allocation5], 1

</llo_original>
